<compile_context>
chip_gen: v5e
topology: v5e:2x2
jax: 0.10.0
libtpu: 0.0.40
codegen_flags: <defaults>
</compile_context>

<pallas_src>
import functools

import jax
import jax.numpy as jnp
from jax.experimental import pallas as pl
from jax.experimental.pallas import tpu as pltpu

_MiB = 1024 * 1024


def _vmem_limit_bytes():
    """Generation-aware scoped-VMEM limit: ~72% of physical per-core VMEM,
    capped at 96 MiB (v7x: ~46 MiB of 64 MiB; v5e/v6e: ~92 MiB of 128 MiB)."""
    cap = 64 * _MiB  # conservative default (v7x)
    try:
        cap = int(pltpu.get_tpu_info().vmem_capacity_bytes)
    except Exception:
        pass
    cap = max(cap, 32 * _MiB)
    return min((cap * 72) // 100, 96 * _MiB)


def _pick_spatial_tile(hw, c, itemsize, budget_bytes):
    """Spatial tile for the streaming passes.

    Full extent if one (1, C, HW) block fits the budget (a full-extent last
    dim is always layout-legal); otherwise the largest multiple of 128 under
    the budget, capped at 8192 lanes (roofline plateaus past ~512 lanes),
    floor 128. The grid uses cdiv + a masked tail, so the tile does NOT need
    to divide HW."""
    per_lane = max(1, c * itemsize)
    max_lanes = budget_bytes // per_lane
    if hw <= max_lanes:
        return hw
    thw = min((max_lanes // 128) * 128, 8192)
    return max(128, thw)


# ----------------------------- fused path ----------------------------------


def _fused_kernel(x_ref, w1t_ref, w2_ref, o_ref, *, inv_hw):
    """grid=(B,): pool -> MLP -> scale for one batch, x read from HBM once.

    x_ref  : (1, C, HW) native dtype
    w1t_ref: (C, Cr) f32   first Linear weight, transposed to (in, out)
    w2_ref : (C, Cr) f32   second Linear weight, PyTorch layout (out, in)
    o_ref  : (1, C, HW) native dtype
    """
    xb = x_ref[0]                                                    # (C, HW)
    pooled = jnp.sum(xb.astype(jnp.float32), axis=-1, keepdims=True) * inv_hw
    # Excitation on the VPU/XLU (broadcast-mul + reduce); C stays on sublanes,
    # no transposes, no tiny MXU matmuls.
    h = jnp.maximum(
        jnp.sum(w1t_ref[...] * pooled, axis=0, keepdims=True), 0.0)  # (1, Cr)
    s = jax.nn.sigmoid(
        jnp.sum(w2_ref[...] * h, axis=1, keepdims=True))             # (C, 1)
    # Rescale in x's native dtype (bf16 stays bf16 on v6e/v7x VPU).
    o_ref[...] = (xb * s.astype(xb.dtype))[None].astype(o_ref.dtype)


# --------------------------- streaming fallback -----------------------------


def _pool_kernel(x_ref, sum_ref, *, hw, thw, mask_tail):
    """Pass 1: accumulate per-(batch, channel) spatial sums over HW tiles."""
    k = pl.program_id(1)

    @pl.when(k == 0)
    def _():
        sum_ref[...] = jnp.zeros_like(sum_ref)

    xb = x_ref[0].astype(jnp.float32)                                # (C, thw)
    if mask_tail:
        lane = jax.lax.broadcasted_iota(jnp.int32, xb.shape, 1)
        xb = jnp.where(k * thw + lane < hw, xb, 0.0)
    sum_ref[...] += jnp.sum(xb, axis=-1, keepdims=True)[None]


def _excite_kernel(pooled_ref, w1t_ref, w2_ref, gate_ref, *, inv_hw):
    """Tiny excitation MLP on the whole (B, C, 1) pooled tensor (single call,
    off the streaming pass's critical path)."""
    w1t = w1t_ref[...]                                               # (C, Cr)
    w2 = w2_ref[...]                                                 # (C, Cr)
    nb = pooled_ref.shape[0]

    @pl.loop(0, nb)
    def _(i):
        p = pooled_ref[i] * inv_hw                                   # (C, 1)
        h = jnp.maximum(jnp.sum(w1t * p, axis=0, keepdims=True), 0.0)  # (1, Cr)
        s = jax.nn.sigmoid(jnp.sum(w2 * h, axis=1, keepdims=True))     # (C, 1)
        gate_ref[i] = s


def _scale_kernel(gate_ref, x_ref, o_ref):
    """Pass 2: o = x * gate, gate broadcast over the spatial/lane axis."""
    g = gate_ref[...].astype(x_ref.dtype)                            # (1, C, 1)
    o_ref[...] = (x_ref[...] * g).astype(o_ref.dtype)


# --------------------------------- wrapper ----------------------------------


def se_block(x_nchw, w1, w2, *, force_two_pass=False, spatial_tile=None):
    """SEBlock forward.

    x_nchw: (B, C, H, W) float32 or bfloat16
    w1    : (Cr, C) PyTorch nn.Linear weight (out_features, in_features), bias=False
    w2    : (C, Cr) PyTorch nn.Linear weight (out_features, in_features), bias=False
    """
    b, c, h, w = x_nchw.shape
    hw = h * w
    cr, c_in = w1.shape
    c_out, cr2 = w2.shape
    assert c_in == c and cr2 == cr and c_out == c, "SE gate must match channel count"

    x_flat = x_nchw.reshape(b, c, hw)             # free view; HW on the lane axis
    w1t = jnp.asarray(w1, jnp.float32).T          # (C, Cr)
    w2f = jnp.asarray(w2, jnp.float32)            # (C, Cr)

    itemsize = jnp.dtype(x_flat.dtype).itemsize
    inv_hw = 1.0 / float(hw)

    vmem_limit = _vmem_limit_bytes()
    block_budget = max(2 * _MiB, min(16 * _MiB, vmem_limit // 6))

    # Fused working set: double-buffered in + out slabs, one f32 temp for the
    # pooled cast, double-buffered tiny weights.
    slab_bytes = c * hw * itemsize
    fused_working = 4 * slab_bytes + c * hw * 4 + 4 * c * cr * 4
    use_fused = (not force_two_pass) and fused_working <= (vmem_limit * 3) // 4

    if use_fused:
        out_flat = pl.pallas_call(
            functools.partial(_fused_kernel, inv_hw=inv_hw),
            out_shape=jax.ShapeDtypeStruct((b, c, hw), x_flat.dtype),
            grid_spec=pltpu.PrefetchScalarGridSpec(
                num_scalar_prefetch=0,
                grid=(b,),
                in_specs=[
                    pl.BlockSpec((1, c, hw), lambda bi: (bi, 0, 0)),
                    pl.BlockSpec((c, cr), lambda bi: (0, 0)),
                    pl.BlockSpec((c, cr), lambda bi: (0, 0)),
                ],
                out_specs=pl.BlockSpec((1, c, hw), lambda bi: (bi, 0, 0)),
            ),
            compiler_params=pltpu.CompilerParams(
                dimension_semantics=("parallel",),
                vmem_limit_bytes=vmem_limit),
            cost_estimate=pl.CostEstimate(
                flops=2 * b * c * hw + 4 * b * c * cr,
                transcendentals=b * c,
                bytes_accessed=2 * b * c * hw * itemsize + 2 * c * cr * 4),
        )(x_flat, w1t, w2f)
        return out_flat.reshape(b, c, h, w)

    # ------------------- streaming two-pass fallback (large HW) -------------
    thw = spatial_tile if spatial_tile is not None else _pick_spatial_tile(
        hw, c, itemsize, block_budget)
    assert thw == hw or thw % 128 == 0, "spatial tile must be lane-aligned or full"
    n_hw = pl.cdiv(hw, thw)
    mask_tail = (hw % thw) != 0

    # Pass 1: spatial sums (f32 accumulation, resident (1, C, 1) output block).
    sums = pl.pallas_call(
        functools.partial(_pool_kernel, hw=hw, thw=thw, mask_tail=mask_tail),
        out_shape=jax.ShapeDtypeStruct((b, c, 1), jnp.float32),
        grid_spec=pltpu.PrefetchScalarGridSpec(
            num_scalar_prefetch=0,
            grid=(b, n_hw),
            in_specs=[pl.BlockSpec((1, c, thw), lambda bi, ki: (bi, 0, ki))],
            out_specs=pl.BlockSpec((1, c, 1), lambda bi, ki: (bi, 0, 0)),
        ),
        compiler_params=pltpu.CompilerParams(
            dimension_semantics=("parallel", "arbitrary"),
            vmem_limit_bytes=vmem_limit),
        cost_estimate=pl.CostEstimate(
            flops=b * c * hw,
            transcendentals=0,
            bytes_accessed=b * c * hw * itemsize + b * c * 4),
    )(x_flat)

    # Excitation MLP: one tiny call over all batches (whole arrays in VMEM).
    gate = pl.pallas_call(
        functools.partial(_excite_kernel, inv_hw=inv_hw),
        out_shape=jax.ShapeDtypeStruct((b, c, 1), jnp.float32),
        compiler_params=pltpu.CompilerParams(vmem_limit_bytes=vmem_limit),
        cost_estimate=pl.CostEstimate(
            flops=4 * b * c * cr,
            transcendentals=b * c,
            bytes_accessed=2 * b * c * 4 + 2 * c * cr * 4),
    )(sums, w1t, w2f)

    # Pass 2: re-stream x and rescale by the per-(B, C) gate.
    out_flat = pl.pallas_call(
        _scale_kernel,
        out_shape=jax.ShapeDtypeStruct((b, c, hw), x_flat.dtype),
        grid_spec=pltpu.PrefetchScalarGridSpec(
            num_scalar_prefetch=0,
            grid=(b, n_hw),
            in_specs=[
                pl.BlockSpec((1, c, 1), lambda bi, ki: (bi, 0, 0)),
                pl.BlockSpec((1, c, thw), lambda bi, ki: (bi, 0, ki)),
            ],
            out_specs=pl.BlockSpec((1, c, thw), lambda bi, ki: (bi, 0, ki)),
        ),
        compiler_params=pltpu.CompilerParams(
            dimension_semantics=("parallel", "parallel"),
            vmem_limit_bytes=vmem_limit),
        cost_estimate=pl.CostEstimate(
            flops=b * c * hw,
            transcendentals=0,
            bytes_accessed=2 * b * c * hw * itemsize + b * c * 4),
    )(gate, x_flat)

    return out_flat.reshape(b, c, h, w)


if __name__ == "__main__":
    # Mirrors SEBlock(in_channels=4, out_channels=4, reduction=1) (bias=False).
    in_channels = 4
    out_channels = 4
    reduction = 1
    c_red = int(in_channels // reduction)

    key = jax.random.PRNGKey(0)
    kx1, kx2, k1, k2 = jax.random.split(key, 4)

    bound1 = 1.0 / (in_channels ** 0.5)
    bound2 = 1.0 / (c_red ** 0.5)
    w1 = jax.random.uniform(k1, (c_red, in_channels), jnp.float32,
                            minval=-bound1, maxval=bound1)
    w2 = jax.random.uniform(k2, (out_channels, c_red), jnp.float32,
                            minval=-bound2, maxval=bound2)

    def reference(x):
        pooled = jnp.mean(x, axis=(2, 3))                       # (B, C)
        hh = jnp.maximum(pooled @ w1.T, 0.0)                    # (B, Cr)
        ss = jax.nn.sigmoid(hh @ w2.T)                          # (B, C)
        return x * ss[:, :, None, None]

    # 1) Fused single-pass path (slab VMEM-resident).
    x1 = jax.random.normal(kx1, (2, in_channels, 16, 16), dtype=jnp.float32)
    out1 = se_block(x1, w1, w2)
    jax.block_until_ready(out1)
    assert out1.shape == x1.shape and out1.dtype == x1.dtype
    assert jnp.allclose(out1, reference(x1), atol=1e-5, rtol=1e-5)

    # 2) Streaming two-pass fallback with a non-128-aligned HW (masked tail).
    x2 = jax.random.normal(kx2, (2, in_channels, 20, 20), dtype=jnp.float32)
    out2 = se_block(x2, w1, w2, force_two_pass=True, spatial_tile=128)
    jax.block_until_ready(out2)
    assert out2.shape == x2.shape and out2.dtype == x2.dtype
    assert jnp.allclose(out2, reference(x2), atol=1e-5, rtol=1e-5)

    print("KERNEL_OK")
</pallas_src>

<mosaic_0001>
module attributes {stable_mosaic.version = 11 : i64} {
  func.func @_fused_kernel(%arg0: i32, %arg1: memref<1x4x256xf32, #tpu.memory_space<vmem>>, %arg2: memref<4x4xf32, #tpu.memory_space<vmem>>, %arg3: memref<4x4xf32, #tpu.memory_space<vmem>>, %arg4: memref<1x4x256xf32, #tpu.memory_space<vmem>>) attributes {dimension_semantics = [#tpu.dimension_semantics<parallel>], iteration_bounds = array<i64: 2>, scalar_prefetch = 0 : i64, scratch_operands = 0 : i64, tpu.core_type = #tpu.core_type<tc>, window_params = [{transform_indices = @transform_0, window_bounds = array<i64: 1, 4, 256>}, {pipeline_mode = #tpu.pipeline_mode<synchronous>, transform_indices = @transform_1, window_bounds = array<i64: 4, 4>}, {pipeline_mode = #tpu.pipeline_mode<synchronous>, transform_indices = @transform_2, window_bounds = array<i64: 4, 4>}, {transform_indices = @transform_3, window_bounds = array<i64: 1, 4, 256>}]} {
    %c0 = arith.constant 0 : index
    %c0_0 = arith.constant 0 : index
    %c0_1 = arith.constant 0 : index
    %0 = vector.load %arg1[%c0, %c0_0, %c0_1] : memref<1x4x256xf32, #tpu.memory_space<vmem>>, vector<1x4x256xf32>
    %1 = vector.shape_cast %0 : vector<1x4x256xf32> to vector<4x256xf32>
    %cst = arith.constant dense<0.000000e+00> : vector<4xf32>
    %2 = vector.multi_reduction <add>, %1, %cst [1] : vector<4x256xf32> to vector<4xf32>
    %3 = vector.shape_cast %2 : vector<4xf32> to vector<4x1xf32>
    %cst_2 = arith.constant 3.906250e-03 : f32
    %4 = vector.broadcast %cst_2 : f32 to vector<4x1xf32>
    %5 = arith.mulf %3, %4 : vector<4x1xf32>
    %c0_3 = arith.constant 0 : index
    %c0_4 = arith.constant 0 : index
    %6 = vector.load %arg2[%c0_3, %c0_4] : memref<4x4xf32, #tpu.memory_space<vmem>>, vector<4x4xf32>
    %7 = vector.broadcast %5 : vector<4x1xf32> to vector<4x4xf32>
    %8 = arith.mulf %6, %7 : vector<4x4xf32>
    %cst_5 = arith.constant dense<0.000000e+00> : vector<4xf32>
    %9 = vector.multi_reduction <add>, %8, %cst_5 [0] : vector<4x4xf32> to vector<4xf32>
    %10 = vector.shape_cast %9 : vector<4xf32> to vector<1x4xf32>
    %cst_6 = arith.constant 0.000000e+00 : f32
    %11 = vector.broadcast %cst_6 : f32 to vector<1x4xf32>
    %12 = arith.maximumf %10, %11 : vector<1x4xf32>
    %c0_7 = arith.constant 0 : index
    %c0_8 = arith.constant 0 : index
    %13 = vector.load %arg3[%c0_7, %c0_8] : memref<4x4xf32, #tpu.memory_space<vmem>>, vector<4x4xf32>
    %14 = vector.broadcast %12 : vector<1x4xf32> to vector<4x4xf32>
    %15 = arith.mulf %13, %14 : vector<4x4xf32>
    %cst_9 = arith.constant dense<0.000000e+00> : vector<4xf32>
    %16 = vector.multi_reduction <add>, %15, %cst_9 [1] : vector<4x4xf32> to vector<4xf32>
    %17 = vector.shape_cast %16 : vector<4xf32> to vector<4x1xf32>
    %18 = arith.negf %17 : vector<4x1xf32>
    %19 = math.exp %18 : vector<4x1xf32>
    %cst_10 = arith.constant 1.000000e+00 : f32
    %20 = vector.broadcast %cst_10 : f32 to vector<4x1xf32>
    %21 = arith.addf %20, %19 : vector<4x1xf32>
    %22 = arith.divf %20, %21 : vector<4x1xf32>
    %23 = vector.broadcast %22 : vector<4x1xf32> to vector<4x256xf32>
    %24 = arith.mulf %1, %23 : vector<4x256xf32>
    %25 = vector.shape_cast %24 : vector<4x256xf32> to vector<1x4x256xf32>
    %c0_11 = arith.constant 0 : index
    %c0_12 = arith.constant 0 : index
    %c0_13 = arith.constant 0 : index
    %26 = vector.load %arg4[%c0_11, %c0_12, %c0_13] : memref<1x4x256xf32, #tpu.memory_space<vmem>>, vector<1x4x256xf32>
    tpu.vector_store %arg4[%c0_11, %c0_12, %c0_13], %25 {strides = array<i32>} : memref<1x4x256xf32, #tpu.memory_space<vmem>>, vector<1x4x256xf32>,
    return
  }
  func.func @transform_0(%arg0: i32) -> (i32, i32, i32) {
    %c0_i32 = arith.constant 0 : i32
    %c0_i32_0 = arith.constant 0 : i32
    %c0_i32_1 = arith.constant 0 : i32
    return %arg0, %c0_i32, %c0_i32_0 : i32, i32, i32
  }
  func.func @transform_1(%arg0: i32) -> (i32, i32) {
    %c0_i32 = arith.constant 0 : i32
    %c0_i32_0 = arith.constant 0 : i32
    %c0_i32_1 = arith.constant 0 : i32
    return %c0_i32, %c0_i32_0 : i32, i32
  }
  func.func @transform_2(%arg0: i32) -> (i32, i32) {
    %c0_i32 = arith.constant 0 : i32
    %c0_i32_0 = arith.constant 0 : i32
    %c0_i32_1 = arith.constant 0 : i32
    return %c0_i32, %c0_i32_0 : i32, i32
  }
  func.func @transform_3(%arg0: i32) -> (i32, i32, i32) {
    %c0_i32 = arith.constant 0 : i32
    %c0_i32_0 = arith.constant 0 : i32
    %c0_i32_1 = arith.constant 0 : i32
    return %arg0, %c0_i32, %c0_i32_0 : i32, i32, i32
  }
}

</mosaic_0001>

<llo_original>
// kernel: tpu_custom_call.1
$region0: #{tpu_custom_call.1}
  #allocation0 [shape = 'u32[]', space=smem, size = 0x4, offset = 0x4, fixed_abs, tag = 'smem constant byte address 0x4 - core index']
  #allocation1 [shape = 'u32[72,128]{1,0:T(1,128)}', space=vmem, size = 0x9000, scoped, tag = 'internal scratch']
  %s0 = inlined_call_operand.hbm [shape: f32[2,4,256], index: 0, kind: input, shape index: {}]
  %s1 = inlined_call_operand.hbm [shape: f32[4,4], index: 1, kind: input, shape index: {}]
  %s2 = inlined_call_operand.hbm [shape: f32[4,4], index: 2, kind: input, shape index: {}]
  %s3 = inlined_call_operand.hbm [shape: f32[2,4,256], index: 3, kind: output, shape index: {}]
  %s4 = sld [smem:[#allocation0]]
  $region57: #{tpu_custom_call.1} parent=0
    _
  %s6 = ssub.s32 1, %s4
  %s7 = scalar_select 0, %s6, %s4
  $region1: #{tpu_custom_call.1} parent=0
    #allocation2 [shape = 'u8[8192]{0}', space=vmem, size = 0x2000, scoped, tag = 'input window, operand 0']
    #allocation3 [shape = 's32[2]{0}', space=sflag, size = 0x8, scoped, tag = 'scoped memory for tpu_custom_call.1']
    #allocation4 [shape = 's32[2]{0}', space=sflag, size = 0x8, scoped, tag = 'scoped memory for tpu_custom_call.1']
    #allocation5 [shape = 'u8[2048]{0}', space=vmem, size = 0x800, scoped, tag = 'input window, operand 1, single buffered']
    #allocation6 [shape = 's32[1]{0}', space=sflag, size = 0x4, scoped, tag = 'scoped memory for tpu_custom_call.1']
    #allocation7 [shape = 'u8[2048]{0}', space=vmem, size = 0x800, scoped, tag = 'input window, operand 2, single buffered']
    #allocation8 [shape = 'u8[8192]{0}', space=vmem, size = 0x2000, scoped, tag = 'output window, operand 0']
    %8 = vsyncpa [#allocation3], 0
    %s9 = scalar_lea.sflag [#allocation3], 1
    %10 = vsyncpa %s9, 0
    %11 = vsyncpa [#allocation6], 0
    %12 = vsyncpa [#allocation4], 0
    %s13 = scalar_lea.sflag [#allocation4], 1
    %14 = vsyncpa %s13, 0
    loop: start=0, step=1, limit=4
    $region2: #{tpu_custom_call.1} parent=1 // loop_pre_header
      _
    $region3: #{tpu_custom_call.1} parent=1 // loop_header
      %s16 = sphi 0, %s20
      %p17 = scmp.ge.s32.totalorder %s16, 4
      %s26 = sphi 0, %s28
      %s29 = sphi 0, %s26
      %s30 = sphi 0, %s29
      %s46 = sphi 0, %s30
      %s50 = sphi 0, %s50
      %s52 = sphi 0, %s50
      %s53 = sphi 0, %s52
      %s67 = sphi 0, %s53
      %s71 = sphi 0, %s71
      %s73 = sphi 0, %s71
      %s74 = sphi 0, %s73
      %s88 = sphi 0, %s74
      %s94 = sphi 0, %s96
      %s97 = sphi 0, %s94
      %s98 = sphi 0, %s97
      %s114 = sphi 0, %s98
    $region4: #{tpu_custom_call.1} parent=1 // loop_header_branch
      %19 = sbr.rel (%p17) target = $region8
    $region5: #{tpu_custom_call.1} parent=1 // loop_body
      %s21 = ssub.s32 %s16, 1
      %s22 = ssub.s32 %s16, 2
      %s23 = sadd.s32 %s16, 1
      %s24 = ssub.s32 %s16, %s23
      %p25 = scmp.eq.s32.totalorder %s24, 0
      %s27 = sadd.s32 %s26, 1
      %s28 = scalar_select %p25, %s26, %s27
      %p31 = pneg %p25
      %p32 = scmp.eq.s32.totalorder %s16, 1
      %p33 = por %p31, %p32
      %p34 = scmp.ne.s32.totalorder %s26, %s29
      %p35 = scmp.eq.s32.totalorder %s16, 0
      %p36 = por %p34, %p35
      %p37 = scmp.ne.s32.totalorder %s26, %s29
      %p38 = scmp.eq.s32.totalorder %s21, 1
      %p39 = por %p37, %p38
      %p40 = scmp.ne.s32.totalorder %s29, %s30
      %p41 = scmp.eq.s32.totalorder %s21, 0
      %p42 = por %p40, %p41
      %p43 = scmp.ne.s32.totalorder %s29, %s30
      %p44 = scmp.eq.s32.totalorder %s22, 1
      %p45 = por %p43, %p44
      %p47 = scmp.ne.s32.totalorder %s30, %s46
      %p48 = scmp.eq.s32.totalorder %s22, 0
      %p49 = por %p47, %p48
      %s51 = sadd.s32 %s50, 1
      %p54 = scmp.eq.s32.totalorder %s16, 1
      %p55 = scmp.ne.s32.totalorder %s50, %s52
      %p56 = scmp.eq.s32.totalorder %s16, 0
      %p57 = por %p55, %p56
      %p58 = scmp.ne.s32.totalorder %s50, %s52
      %p59 = scmp.eq.s32.totalorder %s21, 1
      %p60 = por %p58, %p59
      %p61 = scmp.ne.s32.totalorder %s52, %s53
      %p62 = scmp.eq.s32.totalorder %s21, 0
      %p63 = por %p61, %p62
      %p64 = scmp.ne.s32.totalorder %s52, %s53
      %p65 = scmp.eq.s32.totalorder %s22, 1
      %p66 = por %p64, %p65
      %p68 = scmp.ne.s32.totalorder %s53, %s67
      %p69 = scmp.eq.s32.totalorder %s22, 0
      %p70 = por %p68, %p69
      %s72 = sadd.s32 %s71, 1
      %p75 = scmp.eq.s32.totalorder %s16, 1
      %p76 = scmp.ne.s32.totalorder %s71, %s73
      %p77 = scmp.eq.s32.totalorder %s16, 0
      %p78 = por %p76, %p77
      %p79 = scmp.ne.s32.totalorder %s71, %s73
      %p80 = scmp.eq.s32.totalorder %s21, 1
      %p81 = por %p79, %p80
      %p82 = scmp.ne.s32.totalorder %s73, %s74
      %p83 = scmp.eq.s32.totalorder %s21, 0
      %p84 = por %p82, %p83
      %p85 = scmp.ne.s32.totalorder %s73, %s74
      %p86 = scmp.eq.s32.totalorder %s22, 1
      %p87 = por %p85, %p86
      %p89 = scmp.ne.s32.totalorder %s74, %s88
      %p90 = scmp.eq.s32.totalorder %s22, 0
      %p91 = por %p89, %p90
      %s92 = ssub.s32 %s16, %s23
      %p93 = scmp.eq.s32.totalorder %s92, 0
      %s95 = sadd.s32 %s94, 1
      %s96 = scalar_select %p93, %s94, %s95
      %p99 = pneg %p93
      %p100 = scmp.eq.s32.totalorder %s16, 1
      %p101 = por %p99, %p100
      %p102 = scmp.ne.s32.totalorder %s94, %s97
      %p103 = scmp.eq.s32.totalorder %s16, 0
      %p104 = por %p102, %p103
      %p105 = scmp.ne.s32.totalorder %s94, %s97
      %p106 = scmp.eq.s32.totalorder %s21, 1
      %p107 = por %p105, %p106
      %p108 = scmp.ne.s32.totalorder %s97, %s98
      %p109 = scmp.eq.s32.totalorder %s21, 0
      %p110 = por %p108, %p109
      %p111 = scmp.ne.s32.totalorder %s97, %s98
      %p112 = scmp.eq.s32.totalorder %s22, 1
      %p113 = por %p111, %p112
      %p115 = scmp.ne.s32.totalorder %s98, %s114
      %p116 = scmp.eq.s32.totalorder %s22, 0
      %p117 = por %p115, %p116
      %p118 = scmp.le.s32.totalorder 1, %s16
      %p119 = scmp.lt.s32.totalorder %s16, 3
      %p120 = pnand %p118, %p119
      %p121 = pneg %p120
      // Predicated region
      $region9: #{tpu_custom_call.1} parent=5 // pred_check
        _
      $region10: #{tpu_custom_call.1} parent=5 // pred_check_branch
        %123 = sbr.rel (%p120) target = $region12
      $region11: #{tpu_custom_call.1} parent=5 // pred_region
        %s124 = ssub.s32 %s16, 1
        // Predicated region
        $region13: #{tpu_custom_call.1} parent=11 // pred_check
          %p125 = pneg %p63
        $region14: #{tpu_custom_call.1} parent=11 // pred_check_branch
          %127 = sbr.rel (%p125) target = $region16
        $region15: #{tpu_custom_call.1} parent=11 // pred_region
          %129 = vsyncadd [#allocation6], 0
          %s131 = sshll.u32 %s1, 4
          %s132 = int_to_ptr.hbm [resolvable:$true] %s131
          %s133 = sshll.u32 [#allocation5], 4
          %s134 = int_to_ptr.vmem [resolvable:$true] %s133
          %136 = dma.hbm_to_vmem [thread:$0]  %s132, 64, %s134, [#allocation6]
        $region16: #{tpu_custom_call.1} parent=11 // pred_fallthru
          _
        // Predicated region
        $region17: #{tpu_custom_call.1} parent=11 // pred_check
          %p137 = pneg %p84
        $region18: #{tpu_custom_call.1} parent=11 // pred_check_branch
          %139 = sbr.rel (%p137) target = $region20
        $region19: #{tpu_custom_call.1} parent=11 // pred_region
          %141 = vsyncadd [#allocation6], 0
          %s143 = sshll.u32 %s2, 4
          %s144 = int_to_ptr.hbm [resolvable:$true] %s143
          %s145 = sshll.u32 [#allocation7], 4
          %s146 = int_to_ptr.vmem [resolvable:$true] %s145
          %148 = dma.hbm_to_vmem [thread:$0]  %s144, 64, %s146, [#allocation6]
        $region20: #{tpu_custom_call.1} parent=11 // pred_fallthru
          _
      $region12: #{tpu_custom_call.1} parent=5 // pred_fallthru
        _
      %p149 = scmp.lt.s32.totalorder %s16, 2
      // Predicated region
      $region21: #{tpu_custom_call.1} parent=5 // pred_check
        %p150 = pneg %p149
      $region22: #{tpu_custom_call.1} parent=5 // pred_check_branch
        %152 = sbr.rel (%p150) target = $region24
      $region23: #{tpu_custom_call.1} parent=5 // pred_region
        // Predicated region
        $region25: #{tpu_custom_call.1} parent=23 // pred_check
          %p153 = pneg %p36
        $region26: #{tpu_custom_call.1} parent=23 // pred_check_branch
          %155 = sbr.rel (%p153) target = $region28
        $region27: #{tpu_custom_call.1} parent=23 // pred_region
          %s156 = sand.u32 %s26, 1
          %s157 = scalar_lea.sflag [#allocation3], %s156
          %s158 = sand.u32 %s26, 1
          %s159 = smul.addr %s158, 8
          %s160 = scalar_lea.vmem [#allocation2], %s159
          %162 = vsyncadd %s157, 0
          %s163 = smul.addr %s16, 2
          %s164 = smul.addr %s163, 4
          %s165 = scalar_lea.hbm %s0, %s164
          %s167 = sshll.u32 %s165, 4
          %s168 = int_to_ptr.hbm [resolvable:$true] %s167
          %s169 = sshll.u32 %s160, 4
          %s170 = int_to_ptr.vmem [resolvable:$true] %s169
          %172 = dma.hbm_to_vmem [thread:$0]  %s168, 128, %s170, %s157
        $region28: #{tpu_custom_call.1} parent=23 // pred_fallthru
          _
      $region24: #{tpu_custom_call.1} parent=5 // pred_fallthru
        _
      %p173 = scmp.le.s32.totalorder 1, %s16
      %p174 = scmp.lt.s32.totalorder %s16, 3
      %p175 = pnand %p173, %p174
      %p176 = pneg %p175
      // Predicated region
      $region29: #{tpu_custom_call.1} parent=5 // pred_check
        _
      $region30: #{tpu_custom_call.1} parent=5 // pred_check_branch
        %178 = sbr.rel (%p175) target = $region32
      $region31: #{tpu_custom_call.1} parent=5 // pred_region
        %s179 = ssub.s32 %s16, 1
        %s180 = sand.u32 %s29, 1
        %s181 = scalar_lea.sflag [#allocation3], %s180
        %s182 = sand.u32 %s29, 1
        %s183 = smul.addr %s182, 8
        %s184 = scalar_lea.vmem [#allocation2], %s183
        // Predicated region
        $region33: #{tpu_custom_call.1} parent=31 // pred_check
          %p185 = pneg %p42
        $region34: #{tpu_custom_call.1} parent=31 // pred_check_branch
          %187 = sbr.rel (%p185) target = $region36
        $region35: #{tpu_custom_call.1} parent=31 // pred_region
          %189 = dma.done %s181, 128
        $region36: #{tpu_custom_call.1} parent=31 // pred_fallthru
          _
        // Predicated region
        $region37: #{tpu_custom_call.1} parent=31 // pred_check
          %p190 = pneg %p63
        $region38: #{tpu_custom_call.1} parent=31 // pred_check_branch
          %192 = sbr.rel (%p190) target = $region40
        $region39: #{tpu_custom_call.1} parent=31 // pred_region
          %194 = dma.done [#allocation6], 64
        $region40: #{tpu_custom_call.1} parent=31 // pred_fallthru
          _
        // Predicated region
        $region41: #{tpu_custom_call.1} parent=31 // pred_check
          %p195 = pneg %p84
        $region42: #{tpu_custom_call.1} parent=31 // pred_check_branch
          %197 = sbr.rel (%p195) target = $region44
        $region43: #{tpu_custom_call.1} parent=31 // pred_region
          %199 = dma.done [#allocation6], 64
        $region44: #{tpu_custom_call.1} parent=31 // pred_fallthru
          _
        %s200 = sand.u32 %s29, 1
        %s201 = scalar_lea.sflag [#allocation3], %s200
        %s202 = sand.u32 %s29, 1
        %s203 = smul.addr %s202, 8
        %s204 = scalar_lea.vmem [#allocation2], %s203
        %p205 = pneg %p42
        %p206 = pneg %p39
        %p207 = pneg %p63
        %p208 = pneg %p60
        %p209 = pneg %p84
        %p210 = pneg %p81
        %p211 = pneg %p110
        %p212 = pneg %p107
        %s213 = sand.u32 %s97, 1
        %s214 = scalar_lea.sflag [#allocation4], %s213
        %s215 = sand.u32 %s97, 1
        %s216 = smul.addr %s215, 8
        %s217 = scalar_lea.vmem [#allocation8], %s216
        %v218 = vld [vmem:[%s184] sm:$0xff]
        %220 = vst [vmem:[#allocation1] ss:$2 sm:$0xff] %v218
        %v221 = vld.sshfl [vmem:[#allocation1] sm:$0xff pattern:$0x75316420]
        %v222 = vld.sshfl [vmem:[#allocation1 + $0x8] sm:$0xff pattern:$0x75316420]
        %vm225 = vcmask 1043456
        %v226 = vsel %vm225, %v221, 0.0
        %v227 = vsel %vm225, %v222, 0.0
        %v228 = vadd.f32 %v226, %v227
        %229 = vadd.xlane.f32.xlu0 %v228
        %v230 = vpop.xlane.xlu0 %229
        %v231 = vmul.f32 %v230, 0.00390625
        %v232 = vld [vmem:[#allocation5] sm:$0xf]
        %v233 = vmul.f32 %v232, %v231
        %vm234 = vcmask 27648
        %v235 = vsel %vm234, %v233, 0.0
        %v236 = vrot.slane %v235, 4
        %v237 = vadd.f32 %v235, %v236
        %v238 = vrot.slane %v237, 2
        %v239 = vadd.f32 %v237, %v238
        %v240 = vrot.slane %v239, 1
        %v241 = vadd.f32 %v239, %v240
        %v242 = vmax.f32 %v241, 0.0
        %v243 = vld [vmem:[#allocation7] sm:$0xf]
        %v244 = vmul.f32 %v243, %v242
        %v245 = vsel %vm234, %v244, 0.0
        %246 = vadd.xlane.f32.xlu0 %v245
        %v247 = vpop.xlane.xlu0 %246
        %v248 = vxor.u32 %v247, 2147483648
        %v249 = vmul.f32 %v248, 1.442695
        %v250 = vpow.pop %v249
        %v251 = vadd.f32 %v250, 1.0
        %v252 = vrcp.pop %v251
        %v253 = vmul.f32 %v251, %v252
        %v254 = vsub.f32 1.0, %v253
        %v255 = vmul.f32 %v252, %v254
        %v256 = vadd.f32 %v252, %v255
        %vm257 = vweird.f32 %v251
        %vm258 = vweird.f32 %v252
        %vm259 = vmor %vm257, %vm258
        %v260 = vsel %vm259, %v252, %v256
        %v261 = vand.u32 2147483647, %v251
        %vm262 = vcmp.eq.f32.partialorder %v261, 8.507059e+37
        %v263 = vand.u32 %v251, 2147483648
        %v264 = vor.u32 1.1754944e-38, %v263
        %v265 = vsel %vm262, %v264, %v260
        %v266 = vmul.f32 1.0, %v265
        %v269 = vunpack.c.l.s4 839922192
        %v270 = vunpack.c.0.s8 %v269
        %v271 = vperm.slane %v266, %v270
        %v273 = vmul.f32 %v218, %v271
        %274 = vst [vmem:[%s217] sm:$0xff] %v273
        %s275 = sand.u32 %s97, 1
        %s276 = scalar_lea.sflag [#allocation4], %s275
        %s277 = sand.u32 %s97, 1
        %s278 = smul.addr %s277, 8
        %s279 = scalar_lea.vmem [#allocation8], %s278
        // Predicated region
        $region45: #{tpu_custom_call.1} parent=31 // pred_check
          %p280 = pneg %p107
        $region46: #{tpu_custom_call.1} parent=31 // pred_check_branch
          %282 = sbr.rel (%p280) target = $region48
        $region47: #{tpu_custom_call.1} parent=31 // pred_region
          %284 = vsyncadd %s276, 0
          %s285 = smul.addr %s21, 2
          %s286 = smul.addr %s285, 4
          %s287 = scalar_lea.hbm %s3, %s286
          %s289 = sshll.u32 %s279, 4
          %s290 = int_to_ptr.vmem [resolvable:$true] %s289
          %s291 = sshll.u32 %s287, 4
          %s292 = int_to_ptr.hbm [resolvable:$true] %s291
          %294 = dma.vmem_to_hbm [thread:$0]  %s290, 128, %s292, %s276
        $region48: #{tpu_custom_call.1} parent=31 // pred_fallthru
          _
      $region32: #{tpu_custom_call.1} parent=5 // pred_fallthru
        _
      %p295 = scmp.le.s32.totalorder 2, %s16
      // Predicated region
      $region49: #{tpu_custom_call.1} parent=5 // pred_check
        %p296 = pneg %p295
      $region50: #{tpu_custom_call.1} parent=5 // pred_check_branch
        %298 = sbr.rel (%p296) target = $region52
      $region51: #{tpu_custom_call.1} parent=5 // pred_region
        %s299 = ssub.s32 %s16, 2
        // Predicated region
        $region53: #{tpu_custom_call.1} parent=51 // pred_check
          %p300 = pneg %p113
        $region54: #{tpu_custom_call.1} parent=51 // pred_check_branch
          %302 = sbr.rel (%p300) target = $region56
        $region55: #{tpu_custom_call.1} parent=51 // pred_region
          %s303 = sand.u32 %s98, 1
          %s304 = scalar_lea.sflag [#allocation4], %s303
          %s305 = sand.u32 %s98, 1
          %s306 = smul.addr %s305, 8
          %s307 = scalar_lea.vmem [#allocation8], %s306
          %309 = dma.done %s304, 128
        $region56: #{tpu_custom_call.1} parent=51 // pred_fallthru
          _
      $region52: #{tpu_custom_call.1} parent=5 // pred_fallthru
        _
    $region6: #{tpu_custom_call.1} parent=1 // loop_footer
      %s20 = sadd.s32 1, %s16
    $region7: #{tpu_custom_call.1} parent=1 // loop_footer_branch
      %15 = sbr.rel target = $region3
    $region8: #{tpu_custom_call.1} parent=1 // loop_exit
      _
    %310 = vsyncpa [#allocation3], 1
    %s311 = scalar_lea.sflag [#allocation3], 1
    %312 = vsyncpa %s311, 1
    %313 = vsyncpa [#allocation6], 1
    %314 = vsyncpa [#allocation4], 1
    %s315 = scalar_lea.sflag [#allocation4], 1
    %316 = vsyncpa %s315, 1

</llo_original>
